<compile_context>
chip_gen: v6e
topology: v6e:2x2x1
jax: 0.10.0
libtpu: 0.0.40
codegen_flags: <defaults>
</compile_context>

<pallas_src>
import jax
import jax.numpy as jnp
from jax.experimental import pallas as pl
from jax.experimental.pallas import tpu as pltpu


def spatial_aware_kernel(x_ref, w1_ref, b1_ref, w2_ref, b2_ref, o_ref):
    # x_ref : (B, S, C)       full array
    # w1_ref: (C, d*H)        fused first-layer weights (already transposed)
    # b1_ref: (1, d*H)        fused first-layer biases
    # w2_ref: (d*H, d*C)      block-diagonal second-layer weights
    # b2_ref: (1, d*C)        fused second-layer biases
    # o_ref : (B, d*C)        lane-dense output slab
    xm = jnp.mean(x_ref[...], axis=1)                                   # (B, C)
    h = jnp.dot(xm, w1_ref[...], preferred_element_type=jnp.float32)    # (B, d*H)
    h = h + b1_ref[...]
    y = jnp.dot(h.astype(w2_ref.dtype), w2_ref[...],
                preferred_element_type=jnp.float32)                     # (B, d*C)
    y = y + b2_ref[...]
    o_ref[...] = y.astype(o_ref.dtype)


def prepare_spatial_aware_params(w1, b1, w2, b2):
    """One-time (out of hot path) fusion of the d branch parameters.

    w1: (d, H, C), b1: (d, H), w2: (d, C, H), b2: (d, C)   (nn.Linear layout)
    Returns:
      w1_all: (C, d*H)   columns = [branch0 | branch1 | ...]
      b1_all: (1, d*H)
      w2_big: (d*H, d*C) block-diagonal, block (i,i) = w2[i].T  (H, C)
      b2_all: (1, d*C)
    """
    d, H, C = w1.shape
    w1_all = jnp.transpose(w1, (2, 0, 1)).reshape(C, d * H)          # (C, d*H)
    b1_all = b1.reshape(1, d * H)                                    # (1, d*H)
    w2t = jnp.transpose(w2, (0, 2, 1))                               # (d, H, C)
    eye = jnp.eye(d, dtype=w2.dtype)
    w2_big = jnp.einsum("dhc,de->dhec", w2t, eye).reshape(d * H, d * C)
    b2_all = b2.reshape(1, d * C)                                    # (1, d*C)
    return w1_all, b1_all, w2_big, b2_all, d, H, C


def spatial_aware_fused(x, w1_all, b1_all, w2_big, b2_all, d, H, C):
    """x: (B, S, C) with pre-fused params. Returns (B, C, d)."""
    B, S, _ = x.shape
    dH = d * H
    dC = d * C

    out = pl.pallas_call(
        spatial_aware_kernel,
        out_shape=jax.ShapeDtypeStruct((B, dC), x.dtype),
        grid_spec=pltpu.PrefetchScalarGridSpec(
            num_scalar_prefetch=0,
            grid=(1,),                                   # single invocation
            in_specs=[
                pl.BlockSpec((B, S, C), lambda i: (0, 0, 0)),   # x (full)
                pl.BlockSpec((C, dH), lambda i: (0, 0)),        # fused W1^T
                pl.BlockSpec((1, dH), lambda i: (0, 0)),        # fused b1
                pl.BlockSpec((dH, dC), lambda i: (0, 0)),       # block-diag W2^T
                pl.BlockSpec((1, dC), lambda i: (0, 0)),        # fused b2
            ],
            out_specs=pl.BlockSpec((B, dC), lambda i: (0, 0)),  # lane-dense slab
        ),
        compiler_params=pltpu.CompilerParams(
            dimension_semantics=("arbitrary",)),
    )(x, w1_all, b1_all, w2_big, b2_all)

    # (B, d*C) -> (B, d, C) -> (B, C, d)  == torch.stack(branches, -1)
    return jnp.transpose(out.reshape(B, d, C), (0, 2, 1))


def spatial_aware(x, w1, b1, w2, b2):
    """Convenience wrapper: fuse params (one-time cost) then run kernel."""
    w1_all, b1_all, w2_big, b2_all, d, H, C = prepare_spatial_aware_params(
        w1, b1, w2, b2)
    return spatial_aware_fused(x, w1_all, b1_all, w2_big, b2_all, d, H, C)


def spatial_aware_ref(x, w1, b1, w2, b2):
    """Pure-JAX reference mirroring the PyTorch forward."""
    xm = jnp.mean(x, axis=1)                                   # (B, C)
    h = jnp.einsum("bc,dhc->dbh", xm, w1) + b1[:, None, :]     # (d, B, H)
    y = jnp.einsum("dbh,dch->dbc", h, w2) + b2[:, None, :]     # (d, B, C)
    return jnp.transpose(y, (1, 2, 0))                         # (B, C, d)


if __name__ == "__main__":
    # Small, deterministic shapes consistent with the module.
    B, S, C, D = 2, 4, 32, 8          # in_channel = 32, d = 8
    H = C // 2

    key = jax.random.PRNGKey(0)
    kx, k1, k2, k3, k4 = jax.random.split(key, 5)

    x = jax.random.normal(kx, (B, S, C), dtype=jnp.float32)
    # Deterministic synthetic "Linear" parameters (nn.Linear shapes: (out, in)).
    w1 = jax.random.normal(k1, (D, H, C), dtype=jnp.float32) * 0.1
    b1 = jax.random.normal(k2, (D, H), dtype=jnp.float32) * 0.1
    w2 = jax.random.normal(k3, (D, C, H), dtype=jnp.float32) * 0.1
    b2 = jax.random.normal(k4, (D, C), dtype=jnp.float32) * 0.1

    # One-time parameter fusion (kept outside the per-call hot path).
    w1_all, b1_all, w2_big, b2_all, d_, H_, C_ = prepare_spatial_aware_params(
        w1, b1, w2, b2)

    out = spatial_aware_fused(x, w1_all, b1_all, w2_big, b2_all, d_, H_, C_)
    out = jax.block_until_ready(out)

    ref = spatial_aware_ref(x, w1, b1, w2, b2)
    assert out.shape == (B, C, D), out.shape
    assert jnp.allclose(out, ref, atol=1e-4, rtol=1e-4), "mismatch vs reference"

    print("KERNEL_OK")
</pallas_src>

<mosaic_0001>
module attributes {stable_mosaic.version = 11 : i64} {
  func.func @spatial_aware_kernel(%arg0: i32, %arg1: memref<2x4x32xf32, #tpu.memory_space<vmem>>, %arg2: memref<32x128xf32, #tpu.memory_space<vmem>>, %arg3: memref<1x128xf32, #tpu.memory_space<vmem>>, %arg4: memref<128x256xf32, #tpu.memory_space<vmem>>, %arg5: memref<1x256xf32, #tpu.memory_space<vmem>>, %arg6: memref<2x256xf32, #tpu.memory_space<vmem>>) attributes {dimension_semantics = [#tpu.dimension_semantics<arbitrary>], iteration_bounds = array<i64: 1>, scalar_prefetch = 0 : i64, scratch_operands = 0 : i64, tpu.core_type = #tpu.core_type<tc>, window_params = [{pipeline_mode = #tpu.pipeline_mode<synchronous>, transform_indices = @transform_0, window_bounds = array<i64: 2, 4, 32>}, {pipeline_mode = #tpu.pipeline_mode<synchronous>, transform_indices = @transform_1, window_bounds = array<i64: 32, 128>}, {pipeline_mode = #tpu.pipeline_mode<synchronous>, transform_indices = @transform_2, window_bounds = array<i64: 1, 128>}, {pipeline_mode = #tpu.pipeline_mode<synchronous>, transform_indices = @transform_3, window_bounds = array<i64: 128, 256>}, {pipeline_mode = #tpu.pipeline_mode<synchronous>, transform_indices = @transform_4, window_bounds = array<i64: 1, 256>}, {pipeline_mode = #tpu.pipeline_mode<synchronous>, transform_indices = @transform_5, window_bounds = array<i64: 2, 256>}]} {
    %c0 = arith.constant 0 : index
    %c0_0 = arith.constant 0 : index
    %c0_1 = arith.constant 0 : index
    %0 = vector.load %arg1[%c0, %c0_0, %c0_1] : memref<2x4x32xf32, #tpu.memory_space<vmem>>, vector<2x4x32xf32>
    %cst = arith.constant dense<0.000000e+00> : vector<2x32xf32>
    %1 = vector.multi_reduction <add>, %0, %cst [1] : vector<2x4x32xf32> to vector<2x32xf32>
    %cst_2 = arith.constant 4.000000e+00 : f32
    %2 = vector.broadcast %cst_2 : f32 to vector<2x32xf32>
    %3 = arith.divf %1, %2 : vector<2x32xf32>
    %c0_3 = arith.constant 0 : index
    %c0_4 = arith.constant 0 : index
    %4 = vector.load %arg2[%c0_3, %c0_4] : memref<32x128xf32, #tpu.memory_space<vmem>>, vector<32x128xf32>
    %cst_5 = arith.constant dense<0.000000e+00> : vector<2x128xf32>
    %5 = tpu.matmul %3, %4, %cst_5 {dimension_numbers = #tpu.dot_dimension_numbers<[1], [0], [0], [1], [0, 0, 1, 1], [], []>} : vector<2x32xf32>, vector<32x128xf32>, vector<2x128xf32> -> vector<2x128xf32>
    %c0_6 = arith.constant 0 : index
    %c0_7 = arith.constant 0 : index
    %6 = vector.load %arg3[%c0_6, %c0_7] : memref<1x128xf32, #tpu.memory_space<vmem>>, vector<1x128xf32>
    %7 = vector.broadcast %6 : vector<1x128xf32> to vector<2x128xf32>
    %8 = arith.addf %5, %7 : vector<2x128xf32>
    %c0_8 = arith.constant 0 : index
    %c0_9 = arith.constant 0 : index
    %9 = vector.load %arg4[%c0_8, %c0_9] : memref<128x256xf32, #tpu.memory_space<vmem>>, vector<128x256xf32>
    %cst_10 = arith.constant dense<0.000000e+00> : vector<2x256xf32>
    %10 = tpu.matmul %8, %9, %cst_10 {dimension_numbers = #tpu.dot_dimension_numbers<[1], [0], [0], [1], [0, 0, 1, 1], [], []>} : vector<2x128xf32>, vector<128x256xf32>, vector<2x256xf32> -> vector<2x256xf32>
    %c0_11 = arith.constant 0 : index
    %c0_12 = arith.constant 0 : index
    %11 = vector.load %arg5[%c0_11, %c0_12] : memref<1x256xf32, #tpu.memory_space<vmem>>, vector<1x256xf32>
    %12 = vector.broadcast %11 : vector<1x256xf32> to vector<2x256xf32>
    %13 = arith.addf %10, %12 : vector<2x256xf32>
    %c0_13 = arith.constant 0 : index
    %c0_14 = arith.constant 0 : index
    %14 = vector.load %arg6[%c0_13, %c0_14] : memref<2x256xf32, #tpu.memory_space<vmem>>, vector<2x256xf32>
    tpu.vector_store %arg6[%c0_13, %c0_14], %13 {strides = array<i32>} : memref<2x256xf32, #tpu.memory_space<vmem>>, vector<2x256xf32>,
    return
  }
  func.func @transform_0(%arg0: i32) -> (i32, i32, i32) {
    %c0_i32 = arith.constant 0 : i32
    %c0_i32_0 = arith.constant 0 : i32
    %c0_i32_1 = arith.constant 0 : i32
    %c0_i32_2 = arith.constant 0 : i32
    return %c0_i32, %c0_i32_0, %c0_i32_1 : i32, i32, i32
  }
  func.func @transform_1(%arg0: i32) -> (i32, i32) {
    %c0_i32 = arith.constant 0 : i32
    %c0_i32_0 = arith.constant 0 : i32
    %c0_i32_1 = arith.constant 0 : i32
    return %c0_i32, %c0_i32_0 : i32, i32
  }
  func.func @transform_2(%arg0: i32) -> (i32, i32) {
    %c0_i32 = arith.constant 0 : i32
    %c0_i32_0 = arith.constant 0 : i32
    %c0_i32_1 = arith.constant 0 : i32
    return %c0_i32, %c0_i32_0 : i32, i32
  }
  func.func @transform_3(%arg0: i32) -> (i32, i32) {
    %c0_i32 = arith.constant 0 : i32
    %c0_i32_0 = arith.constant 0 : i32
    %c0_i32_1 = arith.constant 0 : i32
    return %c0_i32, %c0_i32_0 : i32, i32
  }
  func.func @transform_4(%arg0: i32) -> (i32, i32) {
    %c0_i32 = arith.constant 0 : i32
    %c0_i32_0 = arith.constant 0 : i32
    %c0_i32_1 = arith.constant 0 : i32
    return %c0_i32, %c0_i32_0 : i32, i32
  }
  func.func @transform_5(%arg0: i32) -> (i32, i32) {
    %c0_i32 = arith.constant 0 : i32
    %c0_i32_0 = arith.constant 0 : i32
    %c0_i32_1 = arith.constant 0 : i32
    return %c0_i32, %c0_i32_0 : i32, i32
  }
}

</mosaic_0001>

<llo_original>
// kernel: tpu_custom_call.1
$region0: #{tpu_custom_call.1}
  #allocation0 [shape = 'u32[]', space=smem, size = 0x4, offset = 0x4, fixed_abs, tag = 'smem constant byte address 0x4 - core index']
  #allocation1 [shape = 'u32[144,128]{1,0:T(1,128)}', space=vmem, size = 0x12000, scoped, tag = 'internal scratch']
  %s0 = inlined_call_operand.hbm [shape: f32[2,4,32], index: 0, kind: input, shape index: {}]
  %s1 = inlined_call_operand.hbm [shape: f32[32,128], index: 1, kind: input, shape index: {}]
  %s2 = inlined_call_operand.vmem [shape: f32[1,128], index: 2, kind: input, shape index: {}]
  %s3 = inlined_call_operand.hbm [shape: f32[128,256], index: 3, kind: input, shape index: {}]
  %s4 = inlined_call_operand.vmem [shape: f32[1,256], index: 4, kind: input, shape index: {}]
  %s5 = inlined_call_operand.hbm [shape: f32[2,256], index: 5, kind: output, shape index: {}]
  %s6 = sld [smem:[#allocation0]]
  $region42: #{tpu_custom_call.1} parent=0
    _
  %s8 = ssub.s32 1, %s6
  %s9 = scalar_select 0, %s8, %s6
  $region1: #{tpu_custom_call.1} parent=0
    #allocation2 [shape = 'u8[4096]{0}', space=vmem, size = 0x1000, scoped, tag = 'input window, operand 0, single buffered']
    #allocation3 [shape = 's32[1]{0}', space=sflag, size = 0x4, scoped, tag = 'scoped memory for tpu_custom_call.1']
    #allocation4 [shape = 's32[1]{0}', space=sflag, size = 0x4, scoped, tag = 'scoped memory for tpu_custom_call.1']
    #allocation5 [shape = 'u8[16384]{0}', space=vmem, size = 0x4000, scoped, tag = 'input window, operand 1, single buffered']
    #allocation6 [shape = 's32[1]{0}', space=sflag, size = 0x4, scoped, tag = 'scoped memory for tpu_custom_call.1']
    #allocation7 [shape = 'u8[131072]{0}', space=vmem, size = 0x20000, scoped, tag = 'input window, operand 3, single buffered']
    #allocation8 [shape = 'u8[2048]{0}', space=vmem, size = 0x800, scoped, tag = 'output window, operand 0, single buffered']
    %10 = vsyncpa [#allocation3], 0
    %11 = vsyncpa [#allocation6], 0
    %12 = vsyncpa [#allocation4], 0
    // Predicated region
    $region2: #{tpu_custom_call.1} parent=1 // pred_check
      _
    $region3: #{tpu_custom_call.1} parent=1 // pred_check_branch
      %14 = sbr.rel (0) target = $region5
    $region4: #{tpu_custom_call.1} parent=1 // pred_region
      %s16 = ssub.s32 128, 128
      %17 = vsyncadd [#allocation3], %s16
      %s18 = sshll.u32 [#allocation2], 4
      %s19 = int_to_ptr.vmem [resolvable:$true] %s18
      %24 = dma.hbm_to_vmem [thread:$0]  %s0, 128, %s19, [#allocation3], 64, 64, 4
    $region5: #{tpu_custom_call.1} parent=1 // pred_fallthru
      _
    // Predicated region
    $region6: #{tpu_custom_call.1} parent=1 // pred_check
      _
    $region7: #{tpu_custom_call.1} parent=1 // pred_check_branch
      %26 = sbr.rel (0) target = $region9
    $region8: #{tpu_custom_call.1} parent=1 // pred_region
      %s28 = ssub.s32 512, 512
      %29 = vsyncadd [#allocation6], %s28
      %s30 = sshll.u32 [#allocation5], 4
      %s31 = int_to_ptr.vmem [resolvable:$true] %s30
      %36 = dma.hbm_to_vmem [thread:$0]  %s1, 512, %s31, [#allocation6], 128, 128, 8
    $region9: #{tpu_custom_call.1} parent=1 // pred_fallthru
      _
    // Predicated region
    $region10: #{tpu_custom_call.1} parent=1 // pred_check
      _
    $region11: #{tpu_custom_call.1} parent=1 // pred_check_branch
      %38 = sbr.rel (0) target = $region13
    $region12: #{tpu_custom_call.1} parent=1 // pred_region
      _
    $region13: #{tpu_custom_call.1} parent=1 // pred_fallthru
      _
    // Predicated region
    $region14: #{tpu_custom_call.1} parent=1 // pred_check
      _
    $region15: #{tpu_custom_call.1} parent=1 // pred_check_branch
      %40 = sbr.rel (0) target = $region17
    $region16: #{tpu_custom_call.1} parent=1 // pred_region
      %s42 = ssub.s32 4096, 4096
      %43 = vsyncadd [#allocation6], %s42
      %s44 = sshll.u32 [#allocation7], 4
      %s45 = int_to_ptr.vmem [resolvable:$true] %s44
      %50 = dma.hbm_to_vmem [thread:$0]  %s3, 4096, %s45, [#allocation6], 256, 256, 16
    $region17: #{tpu_custom_call.1} parent=1 // pred_fallthru
      _
    // Predicated region
    $region18: #{tpu_custom_call.1} parent=1 // pred_check
      _
    $region19: #{tpu_custom_call.1} parent=1 // pred_check_branch
      %52 = sbr.rel (0) target = $region21
    $region20: #{tpu_custom_call.1} parent=1 // pred_region
      _
    $region21: #{tpu_custom_call.1} parent=1 // pred_fallthru
      _
    // Predicated region
    $region22: #{tpu_custom_call.1} parent=1 // pred_check
      _
    $region23: #{tpu_custom_call.1} parent=1 // pred_check_branch
      %54 = sbr.rel (0) target = $region25
    $region24: #{tpu_custom_call.1} parent=1 // pred_region
      %55 = dma.done [#allocation3], 128
    $region25: #{tpu_custom_call.1} parent=1 // pred_fallthru
      _
    // Predicated region
    $region26: #{tpu_custom_call.1} parent=1 // pred_check
      _
    $region27: #{tpu_custom_call.1} parent=1 // pred_check_branch
      %57 = sbr.rel (0) target = $region29
    $region28: #{tpu_custom_call.1} parent=1 // pred_region
      %58 = dma.done [#allocation6], 512
    $region29: #{tpu_custom_call.1} parent=1 // pred_fallthru
      _
    // Predicated region
    $region30: #{tpu_custom_call.1} parent=1 // pred_check
      _
    $region31: #{tpu_custom_call.1} parent=1 // pred_check_branch
      %60 = sbr.rel (0) target = $region33
    $region32: #{tpu_custom_call.1} parent=1 // pred_region
      %61 = dma.done [#allocation6], 4096
    $region33: #{tpu_custom_call.1} parent=1 // pred_fallthru
      _
    %v62 = vld [vmem:[#allocation2] sm:$0xf]
    %v63 = vld [vmem:[#allocation2 + $0x4] sm:$0xf]
    %vm64 = vcmask 257024
    %v65 = vsel %vm64, %v62, 0.0
    %v66 = vrot.slane %v65, 4
    %v67 = vadd.f32 %v65, %v66
    %v68 = vrot.slane %v67, 2
    %v69 = vadd.f32 %v67, %v68
    %v70 = vrot.slane %v69, 1
    %v71 = vadd.f32 %v69, %v70
    %v72 = vsel %vm64, %v63, 0.0
    %v73 = vrot.slane %v72, 4
    %v74 = vadd.f32 %v72, %v73
    %v75 = vrot.slane %v74, 2
    %v76 = vadd.f32 %v74, %v75
    %v77 = vrot.slane %v76, 1
    %v78 = vadd.f32 %v76, %v77
    %v79 = vrcp.pop 4.0
    %v80 = vmul.f32 %v71, %v79
    %v81 = vmul.f32 %v78, %v79
    %v82 = vld [vmem:[#allocation5] sm:$0xff]
    %v83 = vld [vmem:[#allocation5 + $0x8] sm:$0xff]
    %v84 = vld [vmem:[#allocation5 + $0x10] sm:$0xff]
    %v85 = vld [vmem:[#allocation5 + $0x18] sm:$0xff]
    %v86 = vld [vmem:[%s2] sm:$0x1]
    %v88 = vlaneseq
    %v89 = vshrl.u32 %v88, 7
    %v90 = vsub.s32 0, %v89
    %v91 = vrot.slane %v86, %v90
    %vm95 = vcmask 1041409
    %v96 = vsel %vm95, %v81, %v80
    %vm97 = vcmask 261120
    %v98 = vsel %vm97, %v96, 0
    %100 = vmatprep.subr.mxu0 0.0
    %101 = vmatpush1.msra.mxu0 0.0
    %102 = vmatprep.subr.mxu0 0.0
    %103 = vmatpush1.msra.mxu0 0.0
    %104 = vmatprep.subr.mxu0 0.0
    %105 = vmatpush1.msra.mxu0 0.0
    %106 = vmatprep.subr.mxu0 0.0
    %107 = vmatpush1.msra.mxu0 0.0
    %108 = vmatprep.subr.mxu0 0.0
    %109 = vmatpush1.msra.mxu0 0.0
    %110 = vmatprep.subr.mxu0 0.0
    %111 = vmatpush1.msra.mxu0 0.0
    %112 = vmatprep.subr.mxu0 0.0
    %113 = vmatpush1.msra.mxu0 0.0
    %114 = vmatprep.subr.mxu0 0.0
    %115 = vmatpush1.msra.mxu0 0.0
    %116 = vmatprep.subr.mxu0 0.0
    %117 = vmatpush1.msra.mxu0 0.0
    %118 = vmatprep.subr.mxu0 0.0
    %119 = vmatpush1.msra.mxu0 0.0
    %120 = vmatprep.subr.mxu0 0.0
    %121 = vmatpush1.msra.mxu0 0.0
    %122 = vmatprep.subr.mxu0 0.0
    %123 = vmatpush1.msra.mxu0 0.0
    %124 = vmatprep.subr.mxu0 0.0
    %125 = vmatpush1.msra.mxu0 %v85
    %126 = vmatprep.subr.mxu0 0.0
    %127 = vmatpush1.msra.mxu0 %v84
    %128 = vmatprep.subr.mxu0 0.0
    %129 = vmatpush1.msra.mxu0 %v83
    %130 = vmatprep.subr.mxu0 0.0
    %131 = vmatpush1.msra.mxu0 %v82
    %132 = vmatprep.subr.mxu0 0.0
    %133 = vmatpush2.msra.mxu0 0.0
    %134 = vmatprep.subr.mxu0 0.0
    %135 = vmatpush2.msra.mxu0 0.0
    %136 = vmatprep.subr.mxu0 0.0
    %137 = vmatpush2.msra.mxu0 0.0
    %138 = vmatprep.subr.mxu0 0.0
    %139 = vmatpush2.msra.mxu0 0.0
    %140 = vmatprep.subr.mxu0 0.0
    %141 = vmatpush2.msra.mxu0 0.0
    %142 = vmatprep.subr.mxu0 0.0
    %143 = vmatpush2.msra.mxu0 0.0
    %144 = vmatprep.subr.mxu0 0.0
    %145 = vmatpush2.msra.mxu0 0.0
    %146 = vmatprep.subr.mxu0 0.0
    %147 = vmatpush2.msra.mxu0 0.0
    %148 = vmatprep.subr.mxu0 0.0
    %149 = vmatpush2.msra.mxu0 0.0
    %150 = vmatprep.subr.mxu0 0.0
    %151 = vmatpush2.msra.mxu0 0.0
    %152 = vmatprep.subr.mxu0 0.0
    %153 = vmatpush2.msra.mxu0 0.0
    %154 = vmatprep.subr.mxu0 0.0
    %155 = vmatpush2.msra.mxu0 0.0
    %156 = vmatprep.subr.mxu0 0.0
    %157 = vmatpush2.msra.mxu0 0.0
    %158 = vmatprep.subr.mxu0 0.0
    %159 = vmatpush2.msra.mxu0 0.0
    %160 = vmatprep.subr.mxu0 0.0
    %161 = vmatpush2.msra.mxu0 0.0
    %162 = vmatprep.subr.mxu0 0.0
    %163 = vmatpush2.msra.mxu0 0.0
    %164 = vmatprep.mubr.f32.mxu0 0.0
    %165 = vmatmul.mubr.f32.gmra.mxu0 %v98
    %v166 = vpop.f32.mrf.mxu0
    %v167 = vadd.f32 %v91, %v166
    %v168 = vpop.f32.mrf.mxu0
    %169 = vdwg.mxu0
    %v170 = vld [vmem:[#allocation7] sm:$0xff]
    %v171 = vld [vmem:[#allocation7 + $0x8] sm:$0xff]
    %v172 = vld [vmem:[#allocation7 + $0x10] sm:$0xff]
    %v173 = vld [vmem:[#allocation7 + $0x18] sm:$0xff]
    %v174 = vld [vmem:[#allocation7 + $0x20] sm:$0xff]
    %v175 = vld [vmem:[#allocation7 + $0x28] sm:$0xff]
    %v176 = vld [vmem:[#allocation7 + $0x30] sm:$0xff]
    %v177 = vld [vmem:[#allocation7 + $0x38] sm:$0xff]
    %v178 = vld [vmem:[#allocation7 + $0x40] sm:$0xff]
    %v179 = vld [vmem:[#allocation7 + $0x48] sm:$0xff]
    %v180 = vld [vmem:[#allocation7 + $0x50] sm:$0xff]
    %v181 = vld [vmem:[#allocation7 + $0x58] sm:$0xff]
    %v182 = vld [vmem:[#allocation7 + $0x60] sm:$0xff]
    %v183 = vld [vmem:[#allocation7 + $0x68] sm:$0xff]
    %v184 = vld [vmem:[#allocation7 + $0x70] sm:$0xff]
    %v185 = vld [vmem:[#allocation7 + $0x78] sm:$0xff]
    %v186 = vld [vmem:[#allocation7 + $0x80] sm:$0xff]
    %v187 = vld [vmem:[#allocation7 + $0x88] sm:$0xff]
    %v188 = vld [vmem:[#allocation7 + $0x90] sm:$0xff]
    %v189 = vld [vmem:[#allocation7 + $0x98] sm:$0xff]
    %v190 = vld [vmem:[#allocation7 + $0xa0] sm:$0xff]
    %v191 = vld [vmem:[#allocation7 + $0xa8] sm:$0xff]
    %v192 = vld [vmem:[#allocation7 + $0xb0] sm:$0xff]
    %v193 = vld [vmem:[#allocation7 + $0xb8] sm:$0xff]
    %v194 = vld [vmem:[#allocation7 + $0xc0] sm:$0xff]
    %v195 = vld [vmem:[#allocation7 + $0xc8] sm:$0xff]
    %v196 = vld [vmem:[#allocation7 + $0xd0] sm:$0xff]
    %v197 = vld [vmem:[#allocation7 + $0xd8] sm:$0xff]
    %v198 = vld [vmem:[#allocation7 + $0xe0] sm:$0xff]
    %v199 = vld [vmem:[#allocation7 + $0xe8] sm:$0xff]
    %v200 = vld [vmem:[#allocation7 + $0xf0] sm:$0xff]
    %v201 = vld [vmem:[#allocation7 + $0xf8] sm:$0xff]
    %v202 = vld [vmem:[%s4] sm:$0x3]
    %v204 = vlaneseq
    %v205 = vshrl.u32 %v204, 7
    %v206 = vsub.s32 0, %v205
    %v207 = vrot.slane %v202, %v206
    %v208 = vlaneseq
    %v209 = vshrl.u32 %v208, 7
    %v210 = vsub.s32 1, %v209
    %v211 = vrot.slane %v202, %v210
    %214 = vmatprep.subr.mxu0 %v201
    %215 = vmatpush1.msra.mxu0 %v200
    %216 = vmatprep.subr.mxu0 %v199
    %217 = vmatpush1.msra.mxu0 %v198
    %218 = vmatprep.subr.mxu0 %v197
    %219 = vmatpush1.msra.mxu0 %v196
    %220 = vmatprep.subr.mxu0 %v195
    %221 = vmatpush1.msra.mxu0 %v194
    %222 = vmatprep.subr.mxu0 %v193
    %223 = vmatpush1.msra.mxu0 %v192
    %224 = vmatprep.subr.mxu0 %v191
    %225 = vmatpush1.msra.mxu0 %v190
    %226 = vmatprep.subr.mxu0 %v189
    %227 = vmatpush1.msra.mxu0 %v188
    %228 = vmatprep.subr.mxu0 %v187
    %229 = vmatpush1.msra.mxu0 %v186
    %230 = vmatprep.subr.mxu0 %v185
    %231 = vmatpush1.msra.mxu0 %v184
    %232 = vmatprep.subr.mxu0 %v183
    %233 = vmatpush1.msra.mxu0 %v182
    %234 = vmatprep.subr.mxu0 %v181
    %235 = vmatpush1.msra.mxu0 %v180
    %236 = vmatprep.subr.mxu0 %v179
    %237 = vmatpush1.msra.mxu0 %v178
    %238 = vmatprep.subr.mxu0 %v177
    %239 = vmatpush1.msra.mxu0 %v176
    %240 = vmatprep.subr.mxu0 %v175
    %241 = vmatpush1.msra.mxu0 %v174
    %242 = vmatprep.subr.mxu0 %v173
    %243 = vmatpush1.msra.mxu0 %v172
    %244 = vmatprep.subr.mxu0 %v171
    %245 = vmatpush1.msra.mxu0 %v170
    %246 = vmatprep.subr.mxu0 0.0
    %247 = vmatpush2.msra.mxu0 0.0
    %248 = vmatprep.subr.mxu0 0.0
    %249 = vmatpush2.msra.mxu0 0.0
    %250 = vmatprep.subr.mxu0 0.0
    %251 = vmatpush2.msra.mxu0 0.0
    %252 = vmatprep.subr.mxu0 0.0
    %253 = vmatpush2.msra.mxu0 0.0
    %254 = vmatprep.subr.mxu0 0.0
    %255 = vmatpush2.msra.mxu0 0.0
    %256 = vmatprep.subr.mxu0 0.0
    %257 = vmatpush2.msra.mxu0 0.0
    %258 = vmatprep.subr.mxu0 0.0
    %259 = vmatpush2.msra.mxu0 0.0
    %260 = vmatprep.subr.mxu0 0.0
    %261 = vmatpush2.msra.mxu0 0.0
    %262 = vmatprep.subr.mxu0 0.0
    %263 = vmatpush2.msra.mxu0 0.0
    %264 = vmatprep.subr.mxu0 0.0
    %265 = vmatpush2.msra.mxu0 0.0
    %266 = vmatprep.subr.mxu0 0.0
    %267 = vmatpush2.msra.mxu0 0.0
    %268 = vmatprep.subr.mxu0 0.0
    %269 = vmatpush2.msra.mxu0 0.0
    %270 = vmatprep.subr.mxu0 0.0
    %271 = vmatpush2.msra.mxu0 0.0
    %272 = vmatprep.subr.mxu0 0.0
    %273 = vmatpush2.msra.mxu0 0.0
    %274 = vmatprep.subr.mxu0 0.0
    %275 = vmatpush2.msra.mxu0 0.0
    %276 = vmatprep.subr.mxu0 0.0
    %277 = vmatpush2.msra.mxu0 0.0
    %278 = vmatprep.mubr.f32.mxu0 0.0
    %279 = vmatmul.mubr.f32.gmra.mxu0 %v167
    %v280 = vpop.f32.mrf.mxu0
    %v281 = vadd.f32 %v207, %v280
    %v282 = vpop.f32.mrf.mxu0
    %v283 = vadd.f32 %v211, %v282
    %284 = vdwg.mxu0
    %v287 = vcombine.low %v281, %v283
    %v289 = vunpack.c.l.s4 1983009808
    %v290 = vunpack.c.0.s8 %v289
    %v291 = vlaneseq
    %v292 = vshrl.u32 %v291, 7
    %v293 = vsub.s32 %v290, %v292
    %v294 = vrot.slane %v287, %v293
    %296 = vst [vmem:[#allocation8] sm:$0xf] %v294
    // Predicated region
    $region34: #{tpu_custom_call.1} parent=1 // pred_check
      _
    $region35: #{tpu_custom_call.1} parent=1 // pred_check_branch
      %298 = sbr.rel (0) target = $region37
    $region36: #{tpu_custom_call.1} parent=1 // pred_region
      %s300 = ssub.s32 64, 64
      %301 = vsyncadd [#allocation4], %s300
      %s303 = sshll.u32 [#allocation8], 4
      %s304 = int_to_ptr.vmem [resolvable:$true] %s303
      %306 = dma.vmem_to_hbm [thread:$0]  %s304, 64, %s5, [#allocation4]
    $region37: #{tpu_custom_call.1} parent=1 // pred_fallthru
      _
    // Predicated region
    $region38: #{tpu_custom_call.1} parent=1 // pred_check
      _
    $region39: #{tpu_custom_call.1} parent=1 // pred_check_branch
      %308 = sbr.rel (0) target = $region41
    $region40: #{tpu_custom_call.1} parent=1 // pred_region
      %309 = dma.done [#allocation4], 64
    $region41: #{tpu_custom_call.1} parent=1 // pred_fallthru
      _
    %310 = vsyncpa [#allocation3], 1
    %311 = vsyncpa [#allocation6], 1
    %312 = vsyncpa [#allocation4], 1

</llo_original>
